<compile_context>
chip_gen: v7x
topology: tpu7x:2x2x1
jax: 0.10.0
libtpu: 0.0.40
codegen_flags: <defaults>
</compile_context>

<pallas_src>
import math

import jax
import jax.numpy as jnp
from jax.experimental import pallas as pl
from jax.experimental.pallas import tpu as pltpu

_A = math.sqrt(2.0 / math.pi)   # sqrt(2/pi)
_B = _A * 0.044715              # folded: A*(x + c*x^3) == x*(A + B*x^2)


def gelu_kernel(x_ref, o_ref):
    # f32 in-register math (kernel is HBM-bound; VALU/EUP have slack), cast
    # back to the I/O dtype on store so bf16 I/O halves HBM traffic.
    x = x_ref[...].astype(jnp.float32)
    inner = x * (_A + _B * (x * x))
    o_ref[...] = (0.5 * x * (1.0 + jnp.tanh(inner))).astype(o_ref.dtype)


def _round_up(v, m):
    return ((v + m - 1) // m) * m


def _block_params():
    """(target block bytes, scoped-VMEM limit) per chip generation."""
    target = 4 * 1024 * 1024            # v5e / v6e: ~85%+ of HBM roofline
    try:
        info = pltpu.get_tpu_info()
        vmem = getattr(info, "vmem_capacity_bytes", None)
        if vmem is not None and vmem <= 80 * 1024 * 1024:
            # v7x-class (64 MiB VMEM/TC, ~3.2 TB/s HBM): larger blocks to
            # amortize per-grid-step overhead.
            target = 6 * 1024 * 1024
    except Exception:
        pass
    # in + out, double-buffered = 4*target; leave ~50% headroom.
    vmem_limit = min(40 * 1024 * 1024, max(24 * 1024 * 1024, 6 * target))
    return target, int(vmem_limit)


def _pick_tc(rows, C, itemsize, target):
    """Column block: full extent, or a multiple of 128 near the byte budget."""
    if rows * C * itemsize <= target or C <= 128:
        return C
    tc = max(128, (target // (rows * itemsize)) // 128 * 128)
    return min(tc, C)


def _choose_tiles(R, C, itemsize, target):
    """(tr, tc) satisfying the (8,128)-or-full-extent rule, ~target bytes."""
    if R <= 8:
        tr = R                                      # full extent (legal)
        tc = _pick_tc(tr, C, itemsize, target)      # budget uses the REAL row count
        return tr, tc
    tc = _pick_tc(8, C, itemsize, target)
    tr = max(8, (target // (tc * itemsize)) // 8 * 8)
    tr = min(tr, _round_up(R, 8))
    # Even parallel block count => balanced work across the two v7x
    # TensorCores; on 1-TC chips the cost is one extra ~0.35 us grid step.
    nr = pl.cdiv(R, tr)
    if nr % 2 == 1 and nr < 16 and R * C * itemsize >= target:
        tr = max(8, _round_up(pl.cdiv(R, nr + 1), 8))
    return tr, tc


def gelu(x):
    orig_shape = x.shape
    n = x.size
    if n == 0:
        return x
    itemsize = jnp.dtype(x.dtype).itemsize
    target, vmem_limit = _block_params()

    # Lane-dense slab: pick the widest W = 128*k (k <= 16) dividing numel so
    # every vreg row is fully populated and stores are unmasked.
    if n % 128 == 0:
        W = 128
        for k in (16, 8, 4, 2):
            if n % (128 * k) == 0:
                W = 128 * k
                break
        x2d = x.reshape(-1, W)
    elif x.ndim >= 2:
        # Rare fallback (numel not a multiple of 128): keep the natural last
        # dim and let Pallas mask the boundary blocks.
        x2d = x.reshape(-1, orig_shape[-1])
    else:
        x2d = x.reshape(1, -1)

    R, C = x2d.shape
    tr, tc = _choose_tiles(R, C, itemsize, target)
    grid = (pl.cdiv(R, tr), pl.cdiv(C, tc))

    cost = pl.CostEstimate(
        flops=7 * n, transcendentals=n, bytes_accessed=2 * n * itemsize
    )

    out = pl.pallas_call(
        gelu_kernel,
        out_shape=jax.ShapeDtypeStruct((R, C), x2d.dtype),
        grid_spec=pltpu.PrefetchScalarGridSpec(
            num_scalar_prefetch=0,
            grid=grid,
            in_specs=[pl.BlockSpec((tr, tc), lambda i, j: (i, j))],
            out_specs=pl.BlockSpec((tr, tc), lambda i, j: (i, j)),
        ),
        compiler_params=pltpu.CompilerParams(
            dimension_semantics=("parallel", "parallel"),
            vmem_limit_bytes=vmem_limit,
        ),
        cost_estimate=cost,
    )(x2d)

    return out.reshape(orig_shape)


def gelu_ref(x):
    # Pure-JAX reference matching the PyTorch forward (tanh approximation),
    # computed in f32 and cast back like the kernel.
    xf = x.astype(jnp.float32)
    y = 0.5 * xf * (1.0 + jnp.tanh(_A * (xf + 0.044715 * xf * xf * xf)))
    return y.astype(x.dtype)


if __name__ == "__main__":
    key = jax.random.PRNGKey(0)

    # Transformer-style activation: (batch=2, seq=8, hidden=32), f32.
    x = jax.random.normal(key, (2, 8, 32), dtype=jnp.float32)
    y = gelu(x)
    jax.block_until_ready(y)
    assert y.shape == x.shape and y.dtype == x.dtype
    assert jnp.allclose(y, gelu_ref(x), atol=1e-5, rtol=1e-5)

    # numel not a multiple of 128: exercises the masked fallback path.
    x2 = jax.random.normal(jax.random.PRNGKey(1), (3, 5, 40), dtype=jnp.float32)
    y2 = gelu(x2)
    jax.block_until_ready(y2)
    assert jnp.allclose(y2, gelu_ref(x2), atol=1e-5, rtol=1e-5)

    # bf16 I/O path (f32 math in-kernel, bf16 store), lane-dense reshape.
    x3 = jax.random.normal(jax.random.PRNGKey(2), (2, 8, 32), dtype=jnp.bfloat16)
    y3 = gelu(x3)
    jax.block_until_ready(y3)
    assert y3.dtype == jnp.bfloat16
    assert jnp.allclose(
        y3.astype(jnp.float32), gelu_ref(x3).astype(jnp.float32), atol=2e-2, rtol=2e-2
    )

    # Multi-block grid (8 MiB f32): exercises tiling + even block-count logic.
    x4 = jax.random.normal(jax.random.PRNGKey(3), (2, 1024, 1024), dtype=jnp.float32)
    y4 = gelu(x4)
    jax.block_until_ready(y4)
    assert jnp.allclose(y4, gelu_ref(x4), atol=1e-5, rtol=1e-5)

    print("KERNEL_OK")
</pallas_src>

<mosaic_0001>
module attributes {stable_mosaic.version = 11 : i64} {
  func.func @gelu_kernel(%arg0: i32, %arg1: i32, %arg2: memref<1x512xf32, #tpu.memory_space<vmem>>, %arg3: memref<1x512xf32, #tpu.memory_space<vmem>>) attributes {dimension_semantics = [#tpu.dimension_semantics<parallel>, #tpu.dimension_semantics<parallel>], iteration_bounds = array<i64: 1, 1>, scalar_prefetch = 0 : i64, scratch_operands = 0 : i64, tpu.core_type = #tpu.core_type<tc>, window_params = [{transform_indices = @transform_0, window_bounds = array<i64: 1, 512>}, {transform_indices = @transform_1, window_bounds = array<i64: 1, 512>}]} {
    %c0 = arith.constant 0 : index
    %c0_0 = arith.constant 0 : index
    %0 = vector.load %arg2[%c0, %c0_0] : memref<1x512xf32, #tpu.memory_space<vmem>>, vector<1x512xf32>
    %1 = arith.mulf %0, %0 : vector<1x512xf32>
    %cst = arith.constant 0.0356774069 : f32
    %2 = vector.broadcast %cst : f32 to vector<1x512xf32>
    %3 = arith.mulf %2, %1 : vector<1x512xf32>
    %cst_1 = arith.constant 0.797884583 : f32
    %4 = vector.broadcast %cst_1 : f32 to vector<1x512xf32>
    %5 = arith.addf %4, %3 : vector<1x512xf32>
    %6 = arith.mulf %0, %5 : vector<1x512xf32>
    %cst_2 = arith.constant 5.000000e-01 : f32
    %7 = vector.broadcast %cst_2 : f32 to vector<1x512xf32>
    %8 = arith.mulf %7, %0 : vector<1x512xf32>
    %9 = math.tanh %6 : vector<1x512xf32>
    %cst_3 = arith.constant 1.000000e+00 : f32
    %10 = vector.broadcast %cst_3 : f32 to vector<1x512xf32>
    %11 = arith.addf %10, %9 : vector<1x512xf32>
    %12 = arith.mulf %8, %11 : vector<1x512xf32>
    %c0_4 = arith.constant 0 : index
    %c0_5 = arith.constant 0 : index
    %13 = vector.load %arg3[%c0_4, %c0_5] : memref<1x512xf32, #tpu.memory_space<vmem>>, vector<1x512xf32>
    tpu.vector_store %arg3[%c0_4, %c0_5], %12 {strides = array<i32>} : memref<1x512xf32, #tpu.memory_space<vmem>>, vector<1x512xf32>,
    return
  }
  func.func @transform_0(%arg0: i32, %arg1: i32) -> (i32, i32) {
    %c0_i32 = arith.constant 0 : i32
    return %arg0, %arg1 : i32, i32
  }
  func.func @transform_1(%arg0: i32, %arg1: i32) -> (i32, i32) {
    %c0_i32 = arith.constant 0 : i32
    return %arg0, %arg1 : i32, i32
  }
}

</mosaic_0001>

<llo_original>
// kernel: tpu_custom_call.1
$region0: #{tpu_custom_call.1}
  #allocation0 [shape = 'u32[]', space=smem, size = 0x4, offset = 0x4, fixed_abs, tag = 'smem constant byte address 0x4 - core index']
  #allocation1 [shape = 'u32[144,128]{1,0:T(1,128)}', space=vmem, size = 0x12000, scoped, tag = 'internal scratch']
  %s0 = inlined_call_operand.hbm [shape: f32[1,512], index: 0, kind: input, shape index: {}]
  %s1 = inlined_call_operand.hbm [shape: f32[1,512], index: 1, kind: output, shape index: {}]
  %s2 = sld [smem:[#allocation0]]
  $region18: #{tpu_custom_call.1} parent=0
    _
  %s4 = ssub.s32 1, %s2
  %s5 = scalar_select 0, %s4, %s2
  $region1: #{tpu_custom_call.1} parent=0
    #allocation2 [shape = 'u8[2048]{0}', space=vmem, size = 0x800, scoped, tag = 'input window, operand 0, single buffered']
    #allocation3 [shape = 's32[1]{0}', space=sflag, size = 0x4, scoped, tag = 'scoped memory for tpu_custom_call.1']
    #allocation4 [shape = 's32[1]{0}', space=sflag, size = 0x4, scoped, tag = 'scoped memory for tpu_custom_call.1']
    #allocation5 [shape = 'u8[2048]{0}', space=vmem, size = 0x800, scoped, tag = 'output window, operand 0, single buffered']
    %6 = vsyncpa [#allocation3], 0
    %7 = vsyncpa [#allocation4], 0
    // Predicated region
    $region2: #{tpu_custom_call.1} parent=1 // pred_check
      _
    $region3: #{tpu_custom_call.1} parent=1 // pred_check_branch
      %9 = sbr.rel (0) target = $region5
    $region4: #{tpu_custom_call.1} parent=1 // pred_region
      %s11 = ssub.s32 64, 64
      %12 = vsyncadd [#allocation3], %s11
      %s14 = sshll.u32 [#allocation2], 4
      %s15 = int_to_ptr.vmem [resolvable:$true] %s14
      %17 = dma.hbm_to_vmem [thread:$0]  %s0, 64, %s15, [#allocation3]
    $region5: #{tpu_custom_call.1} parent=1 // pred_fallthru
      _
    // Predicated region
    $region6: #{tpu_custom_call.1} parent=1 // pred_check
      _
    $region7: #{tpu_custom_call.1} parent=1 // pred_check_branch
      %19 = sbr.rel (0) target = $region9
    $region8: #{tpu_custom_call.1} parent=1 // pred_region
      %20 = dma.done [#allocation3], 64
    $region9: #{tpu_custom_call.1} parent=1 // pred_fallthru
      _
    %v21 = vld [vmem:[#allocation2] sm:$0xf]
    %v22 = vmul.f32 %v21, %v21
    %v23 = vmul.f32 %v22, 0.035677407
    %v24 = vadd.f32 %v23, 0.7978846
    %v25 = vmul.f32 %v21, %v24
    %v26 = vmul.f32 %v21, 0.5
    %v27 = vtanh.pop %v25
    %v28 = vadd.f32 %v27, 1.0
    %v29 = vmul.f32 %v26, %v28
    %v30 = vlaneseq
    %vm31 = vcmp.ge.s32.totalorder %v30, 0
    %vm32 = vcmp.lt.s32.totalorder %v30, 512
    %vm33 = vmand %vm31, %vm32
    %34 = vst.msk [vmem:[#allocation5] sm:$0xf] %vm33, %v29
    // Predicated region
    $region10: #{tpu_custom_call.1} parent=1 // pred_check
      _
    $region11: #{tpu_custom_call.1} parent=1 // pred_check_branch
      %36 = sbr.rel (0) target = $region13
    $region12: #{tpu_custom_call.1} parent=1 // pred_region
      %s38 = ssub.s32 64, 64
      %39 = vsyncadd [#allocation4], %s38
      %s41 = sshll.u32 [#allocation5], 4
      %s42 = int_to_ptr.vmem [resolvable:$true] %s41
      %44 = dma.vmem_to_hbm [thread:$0]  %s42, 64, %s1, [#allocation4]
    $region13: #{tpu_custom_call.1} parent=1 // pred_fallthru
      _
    // Predicated region
    $region14: #{tpu_custom_call.1} parent=1 // pred_check
      _
    $region15: #{tpu_custom_call.1} parent=1 // pred_check_branch
      %46 = sbr.rel (0) target = $region17
    $region16: #{tpu_custom_call.1} parent=1 // pred_region
      %47 = dma.done [#allocation4], 64
    $region17: #{tpu_custom_call.1} parent=1 // pred_fallthru
      _
    %48 = vsyncpa [#allocation3], 1
    %49 = vsyncpa [#allocation4], 1

</llo_original>
